<compile_context>
chip_gen: v7x
topology: tpu7x:2x2x1
jax: 0.10.0
libtpu: 0.0.40
codegen_flags: <defaults>
</compile_context>

<pallas_src>
import math
from functools import partial

import jax
import jax.numpy as jnp
from jax import lax
from jax.experimental import pallas as pl
from jax.experimental.pallas import tpu as pltpu


def _round_up(a: int, b: int) -> int:
    return ((a + b - 1) // b) * b


def _simnorm_kernel(x_ref, o_ref, *, dim: int):
    # x_ref / o_ref: (tm, C) tiles in VMEM; C % dim == 0 and C % 128 == 0
    # (or C == dim-multiple tiny fallback), so groups of `dim` consecutive
    # lanes never straddle a block / vreg boundary.
    x = x_ref[...].astype(jnp.float32)
    tm, c = x.shape

    if dim == 1:
        # softmax over singleton groups is identically 1
        o_ref[...] = jnp.ones_like(x).astype(o_ref.dtype)
        return

    # Lane position within each simplicial group.
    lane = lax.broadcasted_iota(jnp.int32, (tm, c), dimension=1)
    q = lane % dim

    # Shifts for the segmented all-reduce (butterfly if dim is a power of 2).
    is_pow2 = (dim & (dim - 1)) == 0
    if is_pow2:
        shifts = []
        s = 1
        while s < dim:
            shifts.append(s)
            s *= 2
    else:
        shifts = list(range(1, dim))

    # Masks reused by both the max and the sum reductions.
    masks = {s: (q + s) < dim for s in shifts}

    def partner(v, s):
        # partner[l] = v[group_base(l) + (q(l) + s) % dim]
        # pltpu.roll follows np.roll semantics: roll(v, k)[l] = v[(l - k) % C]
        fwd = pltpu.roll(v, c - s, axis=1)      # v[(l + s) % C]
        wrap = pltpu.roll(v, dim - s, axis=1)   # v[l + s - dim]
        return jnp.where(masks[s], fwd, wrap)

    def seg_allreduce(v, op):
        if is_pow2:
            r = v
            for s in shifts:            # butterfly: log2(dim) steps
                r = op(r, partner(r, s))
            return r
        r = v                            # generic dim: combine all rotations
        for s in shifts:
            r = op(r, partner(v, s))
        return r

    # Numerically-stable softmax over each group of `dim` consecutive lanes.
    m = seg_allreduce(x, jnp.maximum)
    e = jnp.exp(x - m)
    denom = seg_allreduce(e, jnp.add)
    o_ref[...] = (e * pl.reciprocal(denom, approx=True)).astype(o_ref.dtype)


def simnorm(x: jax.Array, dim: int = 8, *,
            target_lanes: int = 512,
            target_block_bytes: int = 1 << 20) -> jax.Array:
    shp = x.shape
    f = shp[-1]
    if f % dim != 0:
        raise ValueError(f"last dim {f} must be divisible by group dim {dim}")
    n = x.size
    if n == 0:
        return x

    dtype = x.dtype
    itemsize = dtype.itemsize
    # Sublane multiple per packed dtype (f32: 8, bf16: 16, int8/fp8: 32).
    sub = {4: 8, 2: 16, 1: 32}.get(itemsize, 8)

    # Lane width: multiple of lcm(128, dim) targeting ~`target_lanes` lanes.
    base = math.lcm(128, dim)
    k = max(1, min(max(1, target_lanes // base), max(1, n // base)))
    c = base * k

    # Row tiling: ~target_block_bytes per block, padded rows, >=2 grid steps
    # when possible (keeps both TensorCores fed on dual-TC chips).
    r = pl.cdiv(n, c)
    tm_target = max(sub, (target_block_bytes // (c * itemsize)) // sub * sub)
    nb = max(1, pl.cdiv(r, tm_target))
    if nb == 1 and r >= 2 * sub:
        nb = 2
    tm = _round_up(pl.cdiv(r, nb), sub)
    r_pad = _round_up(r, tm)
    grid = (r_pad // tm,)

    # Flatten to the lane-dense layout, zero-padding the tail.  Padding is a
    # whole number of groups (n and c are multiples of dim), so it never
    # interacts with real data and is sliced off afterwards.
    flat = x.reshape(-1)
    pad = r_pad * c - n
    if pad:
        flat = jnp.pad(flat, (0, pad))
    x2d = flat.reshape(r_pad, c)

    out2d = pl.pallas_call(
        partial(_simnorm_kernel, dim=dim),
        out_shape=jax.ShapeDtypeStruct((r_pad, c), dtype),
        grid_spec=pltpu.PrefetchScalarGridSpec(
            num_scalar_prefetch=0,
            grid=grid,
            in_specs=[pl.BlockSpec((tm, c), lambda i: (i, 0))],
            out_specs=pl.BlockSpec((tm, c), lambda i: (i, 0)),
        ),
        compiler_params=pltpu.CompilerParams(
            dimension_semantics=("parallel",),
            vmem_limit_bytes=32 * 1024 * 1024,
        ),
        cost_estimate=pl.CostEstimate(
            flops=12 * r_pad * c,
            transcendentals=2 * r_pad * c,
            bytes_accessed=2 * r_pad * c * itemsize,
        ),
    )(x2d)

    out = out2d.reshape(-1)
    if pad:
        out = out[:n]
    return out.reshape(shp)


def _simnorm_ref(x: jax.Array, dim: int = 8) -> jax.Array:
    shp = x.shape
    xg = x.reshape(*shp[:-1], -1, dim)
    return jax.nn.softmax(xg, axis=-1).reshape(shp)


if __name__ == "__main__":
    # SimNorm(dim=8) applied to a (batch=2, seq=8, hidden=32) activation.
    key = jax.random.PRNGKey(0)
    x = jax.random.normal(key, (2, 8, 32), dtype=jnp.float32)

    dim = 8
    y = simnorm(x, dim=dim)
    jax.block_until_ready(y)

    y_ref = _simnorm_ref(x, dim=dim)
    assert y.shape == x.shape and y.dtype == x.dtype
    # approx reciprocal in the kernel -> slightly looser tolerance than 1e-5
    assert jnp.allclose(y, y_ref, atol=2e-3, rtol=2e-3), "mismatch vs reference"

    print("KERNEL_OK")
</pallas_src>

<mosaic_0001>
module attributes {stable_mosaic.version = 11 : i64} {
  func.func @_simnorm_kernel(%arg0: i32, %arg1: memref<8x512xf32, #tpu.memory_space<vmem>>, %arg2: memref<8x512xf32, #tpu.memory_space<vmem>>) attributes {dimension_semantics = [#tpu.dimension_semantics<parallel>], iteration_bounds = array<i64: 1>, scalar_prefetch = 0 : i64, scratch_operands = 0 : i64, tpu.core_type = #tpu.core_type<tc>, window_params = [{transform_indices = @transform_0, window_bounds = array<i64: 8, 512>}, {transform_indices = @transform_1, window_bounds = array<i64: 8, 512>}]} {
    %c0 = arith.constant 0 : index
    %c0_0 = arith.constant 0 : index
    %0 = vector.load %arg1[%c0, %c0_0] : memref<8x512xf32, #tpu.memory_space<vmem>>, vector<8x512xf32>
    %1 = tpu.iota {dimensions = array<i32: 1>} : vector<8x512xi32>
    %c8_i32 = arith.constant 8 : i32
    %c0_i32 = arith.constant 0 : i32
    %2 = arith.cmpi eq, %c8_i32, %c0_i32 : i32
    %c1_i32 = arith.constant 1 : i32
    %3 = arith.select %2, %c1_i32, %c8_i32 : i32
    %4 = vector.broadcast %3 : i32 to vector<8x512xi32>
    %5 = arith.remsi %1, %4 : vector<8x512xi32>
    %c0_i32_1 = arith.constant 0 : i32
    %6 = vector.broadcast %c0_i32_1 : i32 to vector<8x512xi32>
    %7 = arith.cmpi ne, %5, %6 : vector<8x512xi32>
    %c0_i32_2 = arith.constant 0 : i32
    %8 = vector.broadcast %c0_i32_2 : i32 to vector<8x512xi32>
    %9 = arith.cmpi slt, %5, %8 : vector<8x512xi32>
    %c0_i32_3 = arith.constant 0 : i32
    %10 = arith.cmpi slt, %3, %c0_i32_3 : i32
    %11 = vector.broadcast %10 : i1 to vector<8x512xi1>
    %12 = vector.broadcast %11 : vector<8x512xi1> to vector<8x512xi1>
    %13 = arith.xori %9, %12 : vector<8x512xi1>
    %14 = arith.andi %13, %7 : vector<8x512xi1>
    %15 = vector.broadcast %3 : i32 to vector<8x512xi32>
    %16 = arith.addi %5, %15 : vector<8x512xi32>
    %17 = arith.select %14, %16, %5 : vector<8x512xi1>, vector<8x512xi32>
    %c1_i32_4 = arith.constant 1 : i32
    %18 = vector.broadcast %c1_i32_4 : i32 to vector<8x512xi32>
    %19 = arith.addi %17, %18 : vector<8x512xi32>
    %c8_i32_5 = arith.constant 8 : i32
    %20 = vector.broadcast %c8_i32_5 : i32 to vector<8x512xi32>
    %21 = arith.cmpi slt, %19, %20 : vector<8x512xi32>
    %c2_i32 = arith.constant 2 : i32
    %22 = vector.broadcast %c2_i32 : i32 to vector<8x512xi32>
    %23 = arith.addi %17, %22 : vector<8x512xi32>
    %c8_i32_6 = arith.constant 8 : i32
    %24 = vector.broadcast %c8_i32_6 : i32 to vector<8x512xi32>
    %25 = arith.cmpi slt, %23, %24 : vector<8x512xi32>
    %c4_i32 = arith.constant 4 : i32
    %26 = vector.broadcast %c4_i32 : i32 to vector<8x512xi32>
    %27 = arith.addi %17, %26 : vector<8x512xi32>
    %c8_i32_7 = arith.constant 8 : i32
    %28 = vector.broadcast %c8_i32_7 : i32 to vector<8x512xi32>
    %29 = arith.cmpi slt, %27, %28 : vector<8x512xi32>
    %c511_i32 = arith.constant 511 : i32
    %30 = tpu.dynamic_rotate %0 by %c511_i32 dim 1 : vector<8x512xf32>, i32 -> vector<8x512xf32>
    %c7_i32 = arith.constant 7 : i32
    %31 = tpu.dynamic_rotate %0 by %c7_i32 dim 1 : vector<8x512xf32>, i32 -> vector<8x512xf32>
    %32 = arith.select %21, %30, %31 : vector<8x512xi1>, vector<8x512xf32>
    %33 = arith.maximumf %0, %32 : vector<8x512xf32>
    %c510_i32 = arith.constant 510 : i32
    %34 = tpu.dynamic_rotate %33 by %c510_i32 dim 1 : vector<8x512xf32>, i32 -> vector<8x512xf32>
    %c6_i32 = arith.constant 6 : i32
    %35 = tpu.dynamic_rotate %33 by %c6_i32 dim 1 : vector<8x512xf32>, i32 -> vector<8x512xf32>
    %36 = arith.select %25, %34, %35 : vector<8x512xi1>, vector<8x512xf32>
    %37 = arith.maximumf %33, %36 : vector<8x512xf32>
    %c508_i32 = arith.constant 508 : i32
    %38 = tpu.dynamic_rotate %37 by %c508_i32 dim 1 : vector<8x512xf32>, i32 -> vector<8x512xf32>
    %c4_i32_8 = arith.constant 4 : i32
    %39 = tpu.dynamic_rotate %37 by %c4_i32_8 dim 1 : vector<8x512xf32>, i32 -> vector<8x512xf32>
    %40 = arith.select %29, %38, %39 : vector<8x512xi1>, vector<8x512xf32>
    %41 = arith.maximumf %37, %40 : vector<8x512xf32>
    %42 = arith.subf %0, %41 : vector<8x512xf32>
    %43 = math.exp %42 : vector<8x512xf32>
    %c511_i32_9 = arith.constant 511 : i32
    %44 = tpu.dynamic_rotate %43 by %c511_i32_9 dim 1 : vector<8x512xf32>, i32 -> vector<8x512xf32>
    %c7_i32_10 = arith.constant 7 : i32
    %45 = tpu.dynamic_rotate %43 by %c7_i32_10 dim 1 : vector<8x512xf32>, i32 -> vector<8x512xf32>
    %46 = arith.select %21, %44, %45 : vector<8x512xi1>, vector<8x512xf32>
    %47 = arith.addf %43, %46 : vector<8x512xf32>
    %c510_i32_11 = arith.constant 510 : i32
    %48 = tpu.dynamic_rotate %47 by %c510_i32_11 dim 1 : vector<8x512xf32>, i32 -> vector<8x512xf32>
    %c6_i32_12 = arith.constant 6 : i32
    %49 = tpu.dynamic_rotate %47 by %c6_i32_12 dim 1 : vector<8x512xf32>, i32 -> vector<8x512xf32>
    %50 = arith.select %25, %48, %49 : vector<8x512xi1>, vector<8x512xf32>
    %51 = arith.addf %47, %50 : vector<8x512xf32>
    %c508_i32_13 = arith.constant 508 : i32
    %52 = tpu.dynamic_rotate %51 by %c508_i32_13 dim 1 : vector<8x512xf32>, i32 -> vector<8x512xf32>
    %c4_i32_14 = arith.constant 4 : i32
    %53 = tpu.dynamic_rotate %51 by %c4_i32_14 dim 1 : vector<8x512xf32>, i32 -> vector<8x512xf32>
    %54 = arith.select %29, %52, %53 : vector<8x512xi1>, vector<8x512xf32>
    %55 = arith.addf %51, %54 : vector<8x512xf32>
    %56 = tpu.reciprocal %55 {approx = true} : vector<8x512xf32> -> vector<8x512xf32>
    %57 = arith.mulf %43, %56 : vector<8x512xf32>
    %c0_15 = arith.constant 0 : index
    %c0_16 = arith.constant 0 : index
    %58 = vector.load %arg2[%c0_15, %c0_16] : memref<8x512xf32, #tpu.memory_space<vmem>>, vector<8x512xf32>
    tpu.vector_store %arg2[%c0_15, %c0_16], %57 {strides = array<i32>} : memref<8x512xf32, #tpu.memory_space<vmem>>, vector<8x512xf32>,
    return
  }
  func.func @transform_0(%arg0: i32) -> (i32, i32) {
    %c0_i32 = arith.constant 0 : i32
    %c0_i32_0 = arith.constant 0 : i32
    return %arg0, %c0_i32 : i32, i32
  }
  func.func @transform_1(%arg0: i32) -> (i32, i32) {
    %c0_i32 = arith.constant 0 : i32
    %c0_i32_0 = arith.constant 0 : i32
    return %arg0, %c0_i32 : i32, i32
  }
}

</mosaic_0001>

<llo_original>
// kernel: tpu_custom_call.1
$region0: #{tpu_custom_call.1}
  #allocation0 [shape = 'u32[]', space=smem, size = 0x4, offset = 0x4, fixed_abs, tag = 'smem constant byte address 0x4 - core index']
  #allocation1 [shape = 'u32[144,128]{1,0:T(1,128)}', space=vmem, size = 0x12000, scoped, tag = 'internal scratch']
  %s0 = inlined_call_operand.hbm [shape: f32[8,512], index: 0, kind: input, shape index: {}]
  %s1 = inlined_call_operand.hbm [shape: f32[8,512], index: 1, kind: output, shape index: {}]
  %s2 = sld [smem:[#allocation0]]
  $region18: #{tpu_custom_call.1} parent=0
    _
  %s4 = ssub.s32 1, %s2
  %s5 = scalar_select 0, %s4, %s2
  $region1: #{tpu_custom_call.1} parent=0
    #allocation2 [shape = 'u8[16384]{0}', space=vmem, size = 0x4000, scoped, tag = 'input window, operand 0, single buffered']
    #allocation3 [shape = 's32[1]{0}', space=sflag, size = 0x4, scoped, tag = 'scoped memory for tpu_custom_call.1']
    #allocation4 [shape = 's32[1]{0}', space=sflag, size = 0x4, scoped, tag = 'scoped memory for tpu_custom_call.1']
    #allocation5 [shape = 'u8[16384]{0}', space=vmem, size = 0x4000, scoped, tag = 'output window, operand 0, single buffered']
    %6 = vsyncpa [#allocation3], 0
    %7 = vsyncpa [#allocation4], 0
    // Predicated region
    $region2: #{tpu_custom_call.1} parent=1 // pred_check
      _
    $region3: #{tpu_custom_call.1} parent=1 // pred_check_branch
      %9 = sbr.rel (0) target = $region5
    $region4: #{tpu_custom_call.1} parent=1 // pred_region
      %s11 = ssub.s32 512, 512
      %12 = vsyncadd [#allocation3], %s11
      %s14 = sshll.u32 [#allocation2], 4
      %s15 = int_to_ptr.vmem [resolvable:$true] %s14
      %17 = dma.hbm_to_vmem [thread:$0]  %s0, 512, %s15, [#allocation3]
    $region5: #{tpu_custom_call.1} parent=1 // pred_fallthru
      _
    // Predicated region
    $region6: #{tpu_custom_call.1} parent=1 // pred_check
      _
    $region7: #{tpu_custom_call.1} parent=1 // pred_check_branch
      %19 = sbr.rel (0) target = $region9
    $region8: #{tpu_custom_call.1} parent=1 // pred_region
      %20 = dma.done [#allocation3], 512
    $region9: #{tpu_custom_call.1} parent=1 // pred_fallthru
      _
    %v21 = vld [vmem:[#allocation2] sm:$0xff]
    %v22 = vld [vmem:[#allocation2 + $0x8] sm:$0xff]
    %v23 = vld [vmem:[#allocation2 + $0x10] sm:$0xff]
    %v24 = vld [vmem:[#allocation2 + $0x18] sm:$0xff]
    %v25 = vlaneseq
    %v26 = vand.u32 %v25, 127
    %v27 = vadd.s32 %v26, 128
    %v28 = vadd.s32 %v26, 256
    %v29 = vadd.s32 %v26, 384
    %vm30 = vcmp.lt.s32.totalorder %v26, 0
    %v31 = vsub.s32 0, %v26
    %v32 = vsel %vm30, %v31, %v26
    %v33 = vshrl.u32 %v32, 3
    %v34 = vand.u32 %v32, 7
    %v35 = vsub.s32 0, %v34
    %v36 = vsel %vm30, %v35, %v34
    %vm37 = vcmp.lt.s32.totalorder %v27, 0
    %v38 = vsub.s32 0, %v27
    %v39 = vsel %vm37, %v38, %v27
    %v40 = vshrl.u32 %v39, 3
    %v41 = vand.u32 %v39, 7
    %v42 = vsub.s32 0, %v41
    %v43 = vsel %vm37, %v42, %v41
    %vm44 = vcmp.lt.s32.totalorder %v28, 0
    %v45 = vsub.s32 0, %v28
    %v46 = vsel %vm44, %v45, %v28
    %v47 = vshrl.u32 %v46, 3
    %v48 = vand.u32 %v46, 7
    %v49 = vsub.s32 0, %v48
    %v50 = vsel %vm44, %v49, %v48
    %vm51 = vcmp.lt.s32.totalorder %v29, 0
    %v52 = vsub.s32 0, %v29
    %v53 = vsel %vm51, %v52, %v29
    %v54 = vshrl.u32 %v53, 3
    %v55 = vand.u32 %v53, 7
    %v56 = vsub.s32 0, %v55
    %v57 = vsel %vm51, %v56, %v55
    %vm58 = vcmp.ne.s32.totalorder %v36, 0
    %vm59 = vcmp.ne.s32.totalorder %v43, 0
    %vm60 = vcmp.ne.s32.totalorder %v50, 0
    %vm61 = vcmp.ne.s32.totalorder %v57, 0
    %vm62 = vcmp.lt.s32.totalorder %v36, 0
    %vm63 = vcmp.lt.s32.totalorder %v43, 0
    %vm64 = vcmp.lt.s32.totalorder %v50, 0
    %vm65 = vcmp.lt.s32.totalorder %v57, 0
    %vm66 = vmand %vm62, %vm58
    %vm67 = vmand %vm63, %vm59
    %vm68 = vmand %vm64, %vm60
    %vm69 = vmand %vm65, %vm61
    %v70 = vadd.s32 %v36, 8
    %v71 = vadd.s32 %v43, 8
    %v72 = vadd.s32 %v50, 8
    %v73 = vadd.s32 %v57, 8
    %v74 = vsel %vm66, %v70, %v36
    %v75 = vsel %vm67, %v71, %v43
    %v76 = vsel %vm68, %v72, %v50
    %v77 = vsel %vm69, %v73, %v57
    %v78 = vadd.s32 %v74, 1
    %v79 = vadd.s32 %v75, 1
    %v80 = vadd.s32 %v76, 1
    %v81 = vadd.s32 %v77, 1
    %vm82 = vcmp.lt.s32.totalorder %v78, 8
    %vm83 = vcmp.lt.s32.totalorder %v79, 8
    %vm84 = vcmp.lt.s32.totalorder %v80, 8
    %vm85 = vcmp.lt.s32.totalorder %v81, 8
    %v86 = vadd.s32 %v74, 2
    %v87 = vadd.s32 %v75, 2
    %v88 = vadd.s32 %v76, 2
    %v89 = vadd.s32 %v77, 2
    %vm90 = vcmp.lt.s32.totalorder %v86, 8
    %vm91 = vcmp.lt.s32.totalorder %v87, 8
    %vm92 = vcmp.lt.s32.totalorder %v88, 8
    %vm93 = vcmp.lt.s32.totalorder %v89, 8
    %v94 = vadd.s32 %v74, 4
    %v95 = vadd.s32 %v75, 4
    %v96 = vadd.s32 %v76, 4
    %v97 = vadd.s32 %v77, 4
    %vm98 = vcmp.lt.s32.totalorder %v94, 8
    %vm99 = vcmp.lt.s32.totalorder %v95, 8
    %vm100 = vcmp.lt.s32.totalorder %v96, 8
    %vm101 = vcmp.lt.s32.totalorder %v97, 8
    %102 = vrot.lane.b32.xlu0 %v21, 127
    %v103 = vpop.permute.xlu0 %102
    %104 = vrot.lane.b32.xlu0 %v22, 127
    %v105 = vpop.permute.xlu0 %104
    %106 = vrot.lane.b32.xlu0 %v23, 127
    %v107 = vpop.permute.xlu0 %106
    %108 = vrot.lane.b32.xlu0 %v24, 127
    %v109 = vpop.permute.xlu0 %108
    %vm110 = vcmp.lt.s32.totalorder %v26, 127
    %v111 = vsel %vm110, %v107, %v109
    %v112 = vsel %vm110, %v105, %v107
    %v113 = vsel %vm110, %v103, %v105
    %v114 = vsel %vm110, %v109, %v103
    %115 = vrot.lane.b32.xlu0 %v21, 7
    %v116 = vpop.permute.xlu0 %115
    %117 = vrot.lane.b32.xlu0 %v22, 7
    %v118 = vpop.permute.xlu0 %117
    %119 = vrot.lane.b32.xlu0 %v23, 7
    %v120 = vpop.permute.xlu0 %119
    %121 = vrot.lane.b32.xlu0 %v24, 7
    %v122 = vpop.permute.xlu0 %121
    %vm123 = vcmp.lt.s32.totalorder %v26, 7
    %v124 = vsel %vm123, %v120, %v122
    %v125 = vsel %vm123, %v118, %v120
    %v126 = vsel %vm123, %v116, %v118
    %v127 = vsel %vm123, %v122, %v116
    %v128 = vsel %vm82, %v113, %v127
    %v129 = vsel %vm83, %v112, %v126
    %v130 = vsel %vm84, %v111, %v125
    %v131 = vsel %vm85, %v114, %v124
    %v132 = vmax.f32 %v21, %v128
    %v133 = vmax.f32 %v22, %v129
    %v134 = vmax.f32 %v23, %v130
    %v135 = vmax.f32 %v24, %v131
    %136 = vrot.lane.b32.xlu0 %v132, 126
    %v137 = vpop.permute.xlu0 %136
    %138 = vrot.lane.b32.xlu0 %v133, 126
    %v139 = vpop.permute.xlu0 %138
    %140 = vrot.lane.b32.xlu0 %v134, 126
    %v141 = vpop.permute.xlu0 %140
    %142 = vrot.lane.b32.xlu0 %v135, 126
    %v143 = vpop.permute.xlu0 %142
    %vm144 = vcmp.lt.s32.totalorder %v26, 126
    %v145 = vsel %vm144, %v141, %v143
    %v146 = vsel %vm144, %v139, %v141
    %v147 = vsel %vm144, %v137, %v139
    %v148 = vsel %vm144, %v143, %v137
    %149 = vrot.lane.b32.xlu0 %v132, 6
    %v150 = vpop.permute.xlu0 %149
    %151 = vrot.lane.b32.xlu0 %v133, 6
    %v152 = vpop.permute.xlu0 %151
    %153 = vrot.lane.b32.xlu0 %v134, 6
    %v154 = vpop.permute.xlu0 %153
    %155 = vrot.lane.b32.xlu0 %v135, 6
    %v156 = vpop.permute.xlu0 %155
    %vm157 = vcmp.lt.s32.totalorder %v26, 6
    %v158 = vsel %vm157, %v154, %v156
    %v159 = vsel %vm157, %v152, %v154
    %v160 = vsel %vm157, %v150, %v152
    %v161 = vsel %vm157, %v156, %v150
    %v162 = vsel %vm90, %v147, %v161
    %v163 = vsel %vm91, %v146, %v160
    %v164 = vsel %vm92, %v145, %v159
    %v165 = vsel %vm93, %v148, %v158
    %v166 = vmax.f32 %v132, %v162
    %v167 = vmax.f32 %v133, %v163
    %v168 = vmax.f32 %v134, %v164
    %v169 = vmax.f32 %v135, %v165
    %170 = vrot.lane.b32.xlu0 %v166, 124
    %v171 = vpop.permute.xlu0 %170
    %172 = vrot.lane.b32.xlu0 %v167, 124
    %v173 = vpop.permute.xlu0 %172
    %174 = vrot.lane.b32.xlu0 %v168, 124
    %v175 = vpop.permute.xlu0 %174
    %176 = vrot.lane.b32.xlu0 %v169, 124
    %v177 = vpop.permute.xlu0 %176
    %vm178 = vcmp.lt.s32.totalorder %v26, 124
    %v179 = vsel %vm178, %v175, %v177
    %v180 = vsel %vm178, %v173, %v175
    %v181 = vsel %vm178, %v171, %v173
    %v182 = vsel %vm178, %v177, %v171
    %183 = vrot.lane.b32.xlu0 %v166, 4
    %v184 = vpop.permute.xlu0 %183
    %185 = vrot.lane.b32.xlu0 %v167, 4
    %v186 = vpop.permute.xlu0 %185
    %187 = vrot.lane.b32.xlu0 %v168, 4
    %v188 = vpop.permute.xlu0 %187
    %189 = vrot.lane.b32.xlu0 %v169, 4
    %v190 = vpop.permute.xlu0 %189
    %vm191 = vcmp.lt.s32.totalorder %v26, 4
    %v192 = vsel %vm191, %v188, %v190
    %v193 = vsel %vm191, %v186, %v188
    %v194 = vsel %vm191, %v184, %v186
    %v195 = vsel %vm191, %v190, %v184
    %v196 = vsel %vm98, %v181, %v195
    %v197 = vsel %vm99, %v180, %v194
    %v198 = vsel %vm100, %v179, %v193
    %v199 = vsel %vm101, %v182, %v192
    %v200 = vmax.f32 %v166, %v196
    %v201 = vmax.f32 %v167, %v197
    %v202 = vmax.f32 %v168, %v198
    %v203 = vmax.f32 %v169, %v199
    %v204 = vsub.f32 %v21, %v200
    %v205 = vsub.f32 %v22, %v201
    %v206 = vsub.f32 %v23, %v202
    %v207 = vsub.f32 %v24, %v203
    %v208 = vmul.f32 %v204, 1.442695
    %v209 = vpow.pop %v208
    %v210 = vmul.f32 %v205, 1.442695
    %v211 = vpow.pop %v210
    %v212 = vmul.f32 %v206, 1.442695
    %v213 = vpow.pop %v212
    %v214 = vmul.f32 %v207, 1.442695
    %v215 = vpow.pop %v214
    %216 = vrot.lane.b32.xlu0 %v209, 127
    %v217 = vpop.permute.xlu0 %216
    %218 = vrot.lane.b32.xlu0 %v211, 127
    %v219 = vpop.permute.xlu0 %218
    %220 = vrot.lane.b32.xlu0 %v213, 127
    %v221 = vpop.permute.xlu0 %220
    %222 = vrot.lane.b32.xlu0 %v215, 127
    %v223 = vpop.permute.xlu0 %222
    %v224 = vsel %vm110, %v221, %v223
    %v225 = vsel %vm110, %v219, %v221
    %v226 = vsel %vm110, %v217, %v219
    %v227 = vsel %vm110, %v223, %v217
    %228 = vrot.lane.b32.xlu0 %v209, 7
    %v229 = vpop.permute.xlu0 %228
    %230 = vrot.lane.b32.xlu0 %v211, 7
    %v231 = vpop.permute.xlu0 %230
    %232 = vrot.lane.b32.xlu0 %v213, 7
    %v233 = vpop.permute.xlu0 %232
    %234 = vrot.lane.b32.xlu0 %v215, 7
    %v235 = vpop.permute.xlu0 %234
    %v236 = vsel %vm123, %v233, %v235
    %v237 = vsel %vm123, %v231, %v233
    %v238 = vsel %vm123, %v229, %v231
    %v239 = vsel %vm123, %v235, %v229
    %v240 = vsel %vm82, %v226, %v239
    %v241 = vsel %vm83, %v225, %v238
    %v242 = vsel %vm84, %v224, %v237
    %v243 = vsel %vm85, %v227, %v236
    %v244 = vadd.f32 %v209, %v240
    %v245 = vadd.f32 %v211, %v241
    %v246 = vadd.f32 %v213, %v242
    %v247 = vadd.f32 %v215, %v243
    %248 = vrot.lane.b32.xlu0 %v244, 126
    %v249 = vpop.permute.xlu0 %248
    %250 = vrot.lane.b32.xlu0 %v245, 126
    %v251 = vpop.permute.xlu0 %250
    %252 = vrot.lane.b32.xlu0 %v246, 126
    %v253 = vpop.permute.xlu0 %252
    %254 = vrot.lane.b32.xlu0 %v247, 126
    %v255 = vpop.permute.xlu0 %254
    %v256 = vsel %vm144, %v253, %v255
    %v257 = vsel %vm144, %v251, %v253
    %v258 = vsel %vm144, %v249, %v251
    %v259 = vsel %vm144, %v255, %v249
    %260 = vrot.lane.b32.xlu0 %v244, 6
    %v261 = vpop.permute.xlu0 %260
    %262 = vrot.lane.b32.xlu0 %v245, 6
    %v263 = vpop.permute.xlu0 %262
    %264 = vrot.lane.b32.xlu0 %v246, 6
    %v265 = vpop.permute.xlu0 %264
    %266 = vrot.lane.b32.xlu0 %v247, 6
    %v267 = vpop.permute.xlu0 %266
    %v268 = vsel %vm157, %v265, %v267
    %v269 = vsel %vm157, %v263, %v265
    %v270 = vsel %vm157, %v261, %v263
    %v271 = vsel %vm157, %v267, %v261
    %v272 = vsel %vm90, %v258, %v271
    %v273 = vsel %vm91, %v257, %v270
    %v274 = vsel %vm92, %v256, %v269
    %v275 = vsel %vm93, %v259, %v268
    %v276 = vadd.f32 %v244, %v272
    %v277 = vadd.f32 %v245, %v273
    %v278 = vadd.f32 %v246, %v274
    %v279 = vadd.f32 %v247, %v275
    %280 = vrot.lane.b32.xlu0 %v276, 124
    %v281 = vpop.permute.xlu0 %280
    %282 = vrot.lane.b32.xlu0 %v277, 124
    %v283 = vpop.permute.xlu0 %282
    %284 = vrot.lane.b32.xlu0 %v278, 124
    %v285 = vpop.permute.xlu0 %284
    %286 = vrot.lane.b32.xlu0 %v279, 124
    %v287 = vpop.permute.xlu0 %286
    %v288 = vsel %vm178, %v285, %v287
    %v289 = vsel %vm178, %v283, %v285
    %v290 = vsel %vm178, %v281, %v283
    %v291 = vsel %vm178, %v287, %v281
    %292 = vrot.lane.b32.xlu0 %v276, 4
    %v293 = vpop.permute.xlu0 %292
    %294 = vrot.lane.b32.xlu0 %v277, 4
    %v295 = vpop.permute.xlu0 %294
    %296 = vrot.lane.b32.xlu0 %v278, 4
    %v297 = vpop.permute.xlu0 %296
    %298 = vrot.lane.b32.xlu0 %v279, 4
    %v299 = vpop.permute.xlu0 %298
    %v300 = vsel %vm191, %v297, %v299
    %v301 = vsel %vm191, %v295, %v297
    %v302 = vsel %vm191, %v293, %v295
    %v303 = vsel %vm191, %v299, %v293
    %v304 = vsel %vm98, %v290, %v303
    %v305 = vsel %vm99, %v289, %v302
    %v306 = vsel %vm100, %v288, %v301
    %v307 = vsel %vm101, %v291, %v300
    %v308 = vadd.f32 %v276, %v304
    %v309 = vadd.f32 %v277, %v305
    %v310 = vadd.f32 %v278, %v306
    %v311 = vadd.f32 %v279, %v307
    %v312 = vrcp.pop %v308
    %v313 = vrcp.pop %v309
    %v314 = vrcp.pop %v310
    %v315 = vrcp.pop %v311
    %v316 = vmul.f32 %v209, %v312
    %v317 = vmul.f32 %v211, %v313
    %v318 = vmul.f32 %v213, %v314
    %v319 = vmul.f32 %v215, %v315
    %320 = vst [vmem:[#allocation5] sm:$0xff] %v316
    %321 = vst [vmem:[#allocation5 + $0x8] sm:$0xff] %v317
    %322 = vst [vmem:[#allocation5 + $0x10] sm:$0xff] %v318
    %323 = vst [vmem:[#allocation5 + $0x18] sm:$0xff] %v319
    // Predicated region
    $region10: #{tpu_custom_call.1} parent=1 // pred_check
      _
    $region11: #{tpu_custom_call.1} parent=1 // pred_check_branch
      %325 = sbr.rel (0) target = $region13
    $region12: #{tpu_custom_call.1} parent=1 // pred_region
      %s327 = ssub.s32 512, 512
      %328 = vsyncadd [#allocation4], %s327
      %s330 = sshll.u32 [#allocation5], 4
      %s331 = int_to_ptr.vmem [resolvable:$true] %s330
      %333 = dma.vmem_to_hbm [thread:$0]  %s331, 512, %s1, [#allocation4]
    $region13: #{tpu_custom_call.1} parent=1 // pred_fallthru
      _
    // Predicated region
    $region14: #{tpu_custom_call.1} parent=1 // pred_check
      _
    $region15: #{tpu_custom_call.1} parent=1 // pred_check_branch
      %335 = sbr.rel (0) target = $region17
    $region16: #{tpu_custom_call.1} parent=1 // pred_region
      %336 = dma.done [#allocation4], 512
    $region17: #{tpu_custom_call.1} parent=1 // pred_fallthru
      _
    %337 = vsyncpa [#allocation3], 1
    %338 = vsyncpa [#allocation4], 1

</llo_original>
